<compile_context>
chip_gen: v7x
topology: tpu7x:2x2x1
jax: 0.10.0
libtpu: 0.0.40
codegen_flags: <defaults>
</compile_context>

<pallas_src>
import jax
import jax.numpy as jnp
from jax.experimental import pallas as pl
from jax.experimental.pallas import tpu as pltpu


def _round_up(n: int, m: int) -> int:
    return ((n + m - 1) // m) * m


def basic_nn_kernel(params_ref, x_ref, o_ref):
    # params_ref lives in SMEM: [w00, b00, w01, w10, b10, w11, final_bias]
    w00 = params_ref[0]
    b00 = params_ref[1]
    w01 = params_ref[2]
    w10 = params_ref[3]
    b10 = params_ref[4]
    w11 = params_ref[5]
    final_bias = params_ref[6]

    x = x_ref[...].astype(jnp.float32)

    input_to_row1_relu = x * w00 + b00
    row1_relu_output = jnp.maximum(input_to_row1_relu, 0.0)
    scaled_row1_relu_output = row1_relu_output * w01

    input_to_row2_relu = x * w10 + b10
    row2_relu_output = jnp.maximum(input_to_row2_relu, 0.0)
    scaled_row2_relu_output = row2_relu_output * w11

    inputs_to_final_relu = (
        scaled_row1_relu_output + scaled_row2_relu_output + final_bias
    )
    o_ref[...] = jnp.maximum(inputs_to_final_relu, 0.0).astype(o_ref.dtype)


def basic_nn_train_forward(x, params, *, block_rows=256, max_lane_cols=1024):
    """Forward pass of BasicNN_train for an arbitrary-shaped float array.

    x: any shape, float32 or bfloat16. params: (7,) float32 scalars.
    """
    orig_shape = x.shape
    n = x.size
    flat = x.reshape(-1)

    # Lane-dense 2D layout: cols is a (large) multiple of 128.
    cols = min(max_lane_cols, _round_up(n, 128))
    rows = _round_up(n, cols) // cols
    brows = min(block_rows, rows)
    rows_padded = _round_up(rows, brows)
    total = rows_padded * cols
    if total != n:
        flat = jnp.pad(flat, (0, total - n))
    x2d = flat.reshape(rows_padded, cols)

    grid = (rows_padded // brows,)

    out2d = pl.pallas_call(
        basic_nn_kernel,
        out_shape=jax.ShapeDtypeStruct((rows_padded, cols), x.dtype),
        grid=grid,
        in_specs=[
            # 7 scalar parameters in SMEM (read once per grid step).
            pl.BlockSpec(memory_space=pltpu.MemorySpace.SMEM),
            # Lane-dense input tile.
            pl.BlockSpec((brows, cols), lambda i: (i, 0)),
        ],
        out_specs=pl.BlockSpec((brows, cols), lambda i: (i, 0)),
        compiler_params=pltpu.CompilerParams(
            dimension_semantics=("parallel",),
        ),
    )(params, x2d)

    return out2d.reshape(-1)[:n].reshape(orig_shape)


def reference_forward(x, params):
    w00, b00, w01, w10, b10, w11, final_bias = [params[i] for i in range(7)]
    r1 = jnp.maximum(x * w00 + b00, 0.0) * w01
    r2 = jnp.maximum(x * w10 + b10, 0.0) * w11
    return jnp.maximum(r1 + r2 + final_bias, 0.0)


if __name__ == "__main__":
    # Deterministic parameters, matching BasicNN_train.__init__:
    # [w00, b00, w01, w10, b10, w11, final_bias]
    params = jnp.array(
        [1.7, -0.85, -40.8, 12.6, 0.0, 2.7, 0.0], dtype=jnp.float32
    )

    key = jax.random.PRNGKey(0)
    # Small "dose"-like inputs in [0, 1]; arbitrary 4-D shape to exercise the
    # flatten + lane-dense re-layout path.
    x = jax.random.uniform(key, (2, 4, 16, 16), dtype=jnp.float32)

    out = basic_nn_train_forward(x, params)
    out = jax.block_until_ready(out)

    ref = reference_forward(x, params)
    assert out.shape == x.shape and out.dtype == jnp.float32
    # The two relu branches nearly cancel (|r1|,|r2| up to ~35), so a few ULPs
    # of FMA/ordering difference is ~1e-5 absolute; 1e-4 is a safe bound.
    assert jnp.allclose(out, ref, atol=1e-4, rtol=1e-5), "mismatch vs reference"

    # TODO(synk): fused forward+backward (per-tile partial sums for
    # d(loss)/d(final_bias)) would halve HBM reads of x for training steps;
    # only the forward pass is implemented here per the module spec.
    print("KERNEL_OK")
</pallas_src>

<mosaic_0001>
module attributes {stable_mosaic.version = 11 : i64} {
  func.func @basic_nn_kernel(%arg0: i32, %arg1: memref<7xf32, #tpu.memory_space<smem>>, %arg2: memref<2x1024xf32, #tpu.memory_space<vmem>>, %arg3: memref<2x1024xf32, #tpu.memory_space<vmem>>) attributes {dimension_semantics = [#tpu.dimension_semantics<parallel>], iteration_bounds = array<i64: 1>, scalar_prefetch = 0 : i64, scratch_operands = 0 : i64, tpu.core_type = #tpu.core_type<tc>, window_params = [{transform_indices = @transform_0, window_bounds = array<i64: 7>}, {transform_indices = @transform_1, window_bounds = array<i64: 2, 1024>}, {transform_indices = @transform_2, window_bounds = array<i64: 2, 1024>}]} {
    %c0 = arith.constant 0 : index
    %0 = memref.load %arg1[%c0] : memref<7xf32, #tpu.memory_space<smem>>
    %c1 = arith.constant 1 : index
    %1 = memref.load %arg1[%c1] : memref<7xf32, #tpu.memory_space<smem>>
    %c2 = arith.constant 2 : index
    %2 = memref.load %arg1[%c2] : memref<7xf32, #tpu.memory_space<smem>>
    %c3 = arith.constant 3 : index
    %3 = memref.load %arg1[%c3] : memref<7xf32, #tpu.memory_space<smem>>
    %c4 = arith.constant 4 : index
    %4 = memref.load %arg1[%c4] : memref<7xf32, #tpu.memory_space<smem>>
    %c5 = arith.constant 5 : index
    %5 = memref.load %arg1[%c5] : memref<7xf32, #tpu.memory_space<smem>>
    %c6 = arith.constant 6 : index
    %6 = memref.load %arg1[%c6] : memref<7xf32, #tpu.memory_space<smem>>
    %c0_0 = arith.constant 0 : index
    %c0_1 = arith.constant 0 : index
    %7 = vector.load %arg2[%c0_0, %c0_1] : memref<2x1024xf32, #tpu.memory_space<vmem>>, vector<2x1024xf32>
    %8 = vector.broadcast %0 : f32 to vector<2x1024xf32>
    %9 = arith.mulf %7, %8 : vector<2x1024xf32>
    %10 = vector.broadcast %1 : f32 to vector<2x1024xf32>
    %11 = arith.addf %9, %10 : vector<2x1024xf32>
    %cst = arith.constant 0.000000e+00 : f32
    %12 = vector.broadcast %cst : f32 to vector<2x1024xf32>
    %13 = arith.maximumf %11, %12 : vector<2x1024xf32>
    %14 = vector.broadcast %2 : f32 to vector<2x1024xf32>
    %15 = arith.mulf %13, %14 : vector<2x1024xf32>
    %16 = vector.broadcast %3 : f32 to vector<2x1024xf32>
    %17 = arith.mulf %7, %16 : vector<2x1024xf32>
    %18 = vector.broadcast %4 : f32 to vector<2x1024xf32>
    %19 = arith.addf %17, %18 : vector<2x1024xf32>
    %cst_2 = arith.constant 0.000000e+00 : f32
    %20 = vector.broadcast %cst_2 : f32 to vector<2x1024xf32>
    %21 = arith.maximumf %19, %20 : vector<2x1024xf32>
    %22 = vector.broadcast %5 : f32 to vector<2x1024xf32>
    %23 = arith.mulf %21, %22 : vector<2x1024xf32>
    %24 = arith.addf %15, %23 : vector<2x1024xf32>
    %25 = vector.broadcast %6 : f32 to vector<2x1024xf32>
    %26 = arith.addf %24, %25 : vector<2x1024xf32>
    %cst_3 = arith.constant 0.000000e+00 : f32
    %27 = vector.broadcast %cst_3 : f32 to vector<2x1024xf32>
    %28 = arith.maximumf %26, %27 : vector<2x1024xf32>
    %c0_4 = arith.constant 0 : index
    %c0_5 = arith.constant 0 : index
    %29 = vector.load %arg3[%c0_4, %c0_5] : memref<2x1024xf32, #tpu.memory_space<vmem>>, vector<2x1024xf32>
    tpu.vector_store %arg3[%c0_4, %c0_5], %28 {strides = array<i32>} : memref<2x1024xf32, #tpu.memory_space<vmem>>, vector<2x1024xf32>,
    return
  }
  func.func @transform_0(%arg0: i32) -> i32 {
    %c0_i32 = arith.constant 0 : i32
    %c0_i32_0 = arith.constant 0 : i32
    return %c0_i32 : i32
  }
  func.func @transform_1(%arg0: i32) -> (i32, i32) {
    %c0_i32 = arith.constant 0 : i32
    %c0_i32_0 = arith.constant 0 : i32
    return %arg0, %c0_i32 : i32, i32
  }
  func.func @transform_2(%arg0: i32) -> (i32, i32) {
    %c0_i32 = arith.constant 0 : i32
    %c0_i32_0 = arith.constant 0 : i32
    return %arg0, %c0_i32 : i32, i32
  }
}

</mosaic_0001>

<llo_original>
// kernel: tpu_custom_call.1
$region0: #{tpu_custom_call.1}
  #allocation0 [shape = 'u32[]', space=smem, size = 0x4, offset = 0x4, fixed_abs, tag = 'smem constant byte address 0x4 - core index']
  #allocation1 [shape = 'u32[144,128]{1,0:T(1,128)}', space=vmem, size = 0x12000, scoped, tag = 'internal scratch']
  %s0 = inlined_call_operand.hbm [shape: f32[7], index: 0, kind: input, shape index: {}]
  %s1 = inlined_call_operand.hbm [shape: f32[2,1024], index: 1, kind: input, shape index: {}]
  %s2 = inlined_call_operand.hbm [shape: f32[2,1024], index: 2, kind: output, shape index: {}]
  %s3 = sld [smem:[#allocation0]]
  $region26: #{tpu_custom_call.1} parent=0
    _
  %s5 = ssub.s32 1, %s3
  %s6 = scalar_select 0, %s5, %s3
  $region1: #{tpu_custom_call.1} parent=0
    #allocation2 [shape = 'u8[512]{0}', space=smem, size = 0x200, scoped, tag = 'input window, operand 0, single buffered']
    #allocation3 [shape = 's32[1]{0}', space=sflag, size = 0x4, scoped, tag = 'scoped memory for tpu_custom_call.1']
    #allocation4 [shape = 's32[1]{0}', space=sflag, size = 0x4, scoped, tag = 'scoped memory for tpu_custom_call.1']
    #allocation5 [shape = 's32[1]{0}', space=sflag, size = 0x4, scoped, tag = 'scoped memory for tpu_custom_call.1']
    #allocation6 [shape = 'u8[8192]{0}', space=vmem, size = 0x2000, scoped, tag = 'input window, operand 1, single buffered']
    #allocation7 [shape = 'u8[8192]{0}', space=vmem, size = 0x2000, scoped, tag = 'output window, operand 0, single buffered']
    %7 = vsyncpa [#allocation5], 0
    %8 = vsyncpa [#allocation3], 0
    %9 = vsyncpa [#allocation4], 0
    // Predicated region
    $region2: #{tpu_custom_call.1} parent=1 // pred_check
      _
    $region3: #{tpu_custom_call.1} parent=1 // pred_check_branch
      %11 = sbr.rel (0) target = $region5
    $region4: #{tpu_custom_call.1} parent=1 // pred_region
      %s13 = ssub.s32 16, 16
      %14 = vsyncadd [#allocation5], %s13
      %17 = dma.hbm_to_smem %s0, 16, [#allocation2], [#allocation5]
    $region5: #{tpu_custom_call.1} parent=1 // pred_fallthru
      _
    // Predicated region
    $region6: #{tpu_custom_call.1} parent=1 // pred_check
      _
    $region7: #{tpu_custom_call.1} parent=1 // pred_check_branch
      %19 = sbr.rel (0) target = $region9
    $region8: #{tpu_custom_call.1} parent=1 // pred_region
      %s21 = ssub.s32 256, 256
      %22 = vsyncadd [#allocation3], %s21
      %s24 = sshll.u32 [#allocation6], 4
      %s25 = int_to_ptr.vmem [resolvable:$true] %s24
      %27 = dma.hbm_to_vmem [thread:$0]  %s1, 256, %s25, [#allocation3]
    $region9: #{tpu_custom_call.1} parent=1 // pred_fallthru
      _
    // Predicated region
    $region10: #{tpu_custom_call.1} parent=1 // pred_check
      _
    $region11: #{tpu_custom_call.1} parent=1 // pred_check_branch
      %29 = sbr.rel (0) target = $region13
    $region12: #{tpu_custom_call.1} parent=1 // pred_region
      %30 = dma.done [#allocation5], 16
    $region13: #{tpu_custom_call.1} parent=1 // pred_fallthru
      _
    // Predicated region
    $region14: #{tpu_custom_call.1} parent=1 // pred_check
      _
    $region15: #{tpu_custom_call.1} parent=1 // pred_check_branch
      %32 = sbr.rel (0) target = $region17
    $region16: #{tpu_custom_call.1} parent=1 // pred_region
      %33 = dma.done [#allocation3], 256
    $region17: #{tpu_custom_call.1} parent=1 // pred_fallthru
      _
    %34 = sfence
    %s35 = sld [smem:[#allocation2]]
    %s36 = sld [smem:[#allocation2 + $0x1]]
    %s37 = sld [smem:[#allocation2 + $0x2]]
    %s38 = sld [smem:[#allocation2 + $0x3]]
    %s39 = sld [smem:[#allocation2 + $0x4]]
    %s40 = sld [smem:[#allocation2 + $0x5]]
    %s41 = sld [smem:[#allocation2 + $0x6]]
    %v42 = vld [vmem:[#allocation6] sm:$0xff]
    %v43 = vld [vmem:[#allocation6 + $0x8] sm:$0xff]
    %v44 = vstv %s35
    %v45 = vmul.f32 %v42, %v44
    %v46 = vmul.f32 %v43, %v44
    %v47 = vstv %s36
    %v48 = vadd.f32 %v45, %v47
    %v49 = vadd.f32 %v46, %v47
    %v50 = vmax.f32 %v48, 0.0
    %v51 = vmax.f32 %v49, 0.0
    %v52 = vstv %s37
    %v53 = vmul.f32 %v50, %v52
    %v54 = vmul.f32 %v51, %v52
    %v55 = vstv %s38
    %v56 = vmul.f32 %v42, %v55
    %v57 = vmul.f32 %v43, %v55
    %v58 = vstv %s39
    %v59 = vadd.f32 %v56, %v58
    %v60 = vadd.f32 %v57, %v58
    %v61 = vmax.f32 %v59, 0.0
    %v62 = vmax.f32 %v60, 0.0
    %v63 = vstv %s40
    %v64 = vmul.f32 %v61, %v63
    %v65 = vmul.f32 %v62, %v63
    %v66 = vadd.f32 %v53, %v64
    %v67 = vadd.f32 %v54, %v65
    %v68 = vstv %s41
    %v69 = vadd.f32 %v66, %v68
    %v70 = vadd.f32 %v67, %v68
    %v71 = vmax.f32 %v69, 0.0
    %v72 = vmax.f32 %v70, 0.0
    %73 = vst [vmem:[#allocation7] sm:$0xff] %v71
    %74 = vst [vmem:[#allocation7 + $0x8] sm:$0xff] %v72
    // Predicated region
    $region18: #{tpu_custom_call.1} parent=1 // pred_check
      _
    $region19: #{tpu_custom_call.1} parent=1 // pred_check_branch
      %76 = sbr.rel (0) target = $region21
    $region20: #{tpu_custom_call.1} parent=1 // pred_region
      %s78 = ssub.s32 256, 256
      %79 = vsyncadd [#allocation4], %s78
      %s81 = sshll.u32 [#allocation7], 4
      %s82 = int_to_ptr.vmem [resolvable:$true] %s81
      %84 = dma.vmem_to_hbm [thread:$0]  %s82, 256, %s2, [#allocation4]
    $region21: #{tpu_custom_call.1} parent=1 // pred_fallthru
      _
    // Predicated region
    $region22: #{tpu_custom_call.1} parent=1 // pred_check
      _
    $region23: #{tpu_custom_call.1} parent=1 // pred_check_branch
      %86 = sbr.rel (0) target = $region25
    $region24: #{tpu_custom_call.1} parent=1 // pred_region
      %87 = dma.done [#allocation4], 256
    $region25: #{tpu_custom_call.1} parent=1 // pred_fallthru
      _
    %88 = vsyncpa [#allocation3], 1
    %89 = vsyncpa [#allocation4], 1
    %90 = vsyncpa [#allocation5], 1

</llo_original>
